<compile_context>
chip_gen: v6e
topology: v6e:2x2x1
jax: 0.10.0
libtpu: 0.0.40
codegen_flags: <defaults>
</compile_context>

<pallas_src>
import jax
import jax.numpy as jnp
from jax.experimental import pallas as pl
from jax.experimental.pallas import tpu as pltpu


def _copy_kernel(x_ref, o_ref):
    # Identity copy of the current (block_rows, LANE) lane-dense block.
    o_ref[...] = x_ref[...]


def _cdiv(a, b):
    return -(-a // b)


def _sublane_multiple(dtype) -> int:
    # f32 -> 8, bf16/f16 -> 16, int8/fp8 -> 32 (sub-32-bit dtypes pack sublanes).
    itemsize = jnp.dtype(dtype).itemsize
    return max(8, 32 // max(1, itemsize))


def _pick_slab(total, itemsize, sub):
    """Choose lane width, block rows, grid and padded row count for the slab."""
    TARGET_BLOCK_BYTES = 2 * 1024 * 1024  # ~2 MiB/block; 4x (dbl-buffered in+out) fits all gens

    # Prefer a lane width (multiple of 128) that needs no padding.
    lane = None
    for cand in (2048, 1024, 512, 256, 128):
        if total % cand == 0 and (total // cand) % sub == 0:
            lane = cand
            break
    if lane is None:
        lane = 512  # padded path

    rows = _cdiv(total, lane)
    rows = _cdiv(rows, sub) * sub  # sublane-aligned row count

    # Rows per block: fill ~TARGET_BLOCK_BYTES, multiple of the sublane tile.
    block_rows = max(sub, (TARGET_BLOCK_BYTES // (lane * itemsize)) // sub * sub)
    # Guarantee >=2 grid programs when there is enough work (v7x dual-TC sharding).
    if rows >= 2 * sub:
        half = _cdiv(_cdiv(rows, 2), sub) * sub
        block_rows = min(block_rows, half)
    block_rows = min(block_rows, rows)

    grid = _cdiv(rows, block_rows)
    rows_padded = grid * block_rows
    return lane, block_rows, grid, rows_padded


def flatten_layer(x):
    """Equivalent of FlattenLayer().forward(x): row-major flatten to (N, prod(rest))."""
    n = x.shape[0]
    f = 1
    for d in x.shape[1:]:
        f *= d
    total = n * f
    dtype = x.dtype
    itemsize = jnp.dtype(dtype).itemsize

    if total == 0:
        return x.reshape(n, f)

    sub = _sublane_multiple(dtype)
    lane, block_rows, grid, rows_padded = _pick_slab(total, itemsize, sub)
    total_padded = rows_padded * lane

    # Row-major collapse (matches torch .view on contiguous input) — metadata only.
    flat = x.reshape(total)
    if total_padded != total:
        flat = jnp.pad(flat, (0, total_padded - total))
    slab = flat.reshape(rows_padded, lane)

    out = pl.pallas_call(
        _copy_kernel,
        out_shape=jax.ShapeDtypeStruct((rows_padded, lane), dtype),
        grid_spec=pltpu.PrefetchScalarGridSpec(
            num_scalar_prefetch=0,
            grid=(grid,),
            in_specs=[pl.BlockSpec((block_rows, lane), lambda i: (i, 0))],
            out_specs=pl.BlockSpec((block_rows, lane), lambda i: (i, 0)),
        ),
        compiler_params=pltpu.CompilerParams(
            dimension_semantics=("parallel",),
            vmem_limit_bytes=32 * 1024 * 1024,
        ),
        cost_estimate=pl.CostEstimate(
            flops=0,
            transcendentals=0,
            bytes_accessed=2 * total_padded * itemsize,
        ),
    )(slab)

    out_flat = out.reshape(total_padded)
    if total_padded != total:
        out_flat = out_flat[:total]
    return out_flat.reshape(n, f)


if __name__ == "__main__":
    key = jax.random.PRNGKey(0)

    # Small NCHW input: batch=2, channels=4, spatial=16x16  ->  (2, 1024) out.
    x = jax.random.normal(key, (2, 4, 16, 16), dtype=jnp.float32)
    y = jax.block_until_ready(flatten_layer(x))
    y_ref = x.reshape(x.shape[0], -1)
    assert y.shape == (2, 4 * 16 * 16), y.shape
    assert y.dtype == x.dtype
    assert bool(jnp.allclose(y, y_ref)), "mismatch vs reference flatten"

    # Exercise the padded-remainder path (F not a multiple of 128).
    x2 = jax.random.normal(jax.random.PRNGKey(1), (2, 3, 5, 7), dtype=jnp.float32)
    y2 = jax.block_until_ready(flatten_layer(x2))
    assert y2.shape == (2, 3 * 5 * 7), y2.shape
    assert bool(jnp.allclose(y2, x2.reshape(2, -1))), "mismatch on padded path"

    print("KERNEL_OK")
</pallas_src>

<mosaic_0001>
module attributes {stable_mosaic.version = 11 : i64} {
  func.func @_copy_kernel(%arg0: i32, %arg1: memref<8x256xf32, #tpu.memory_space<vmem>>, %arg2: memref<8x256xf32, #tpu.memory_space<vmem>>) attributes {dimension_semantics = [#tpu.dimension_semantics<parallel>], iteration_bounds = array<i64: 1>, scalar_prefetch = 0 : i64, scratch_operands = 0 : i64, tpu.core_type = #tpu.core_type<tc>, window_params = [{transform_indices = @transform_0, window_bounds = array<i64: 8, 256>}, {transform_indices = @transform_1, window_bounds = array<i64: 8, 256>}]} {
    %c0 = arith.constant 0 : index
    %c0_0 = arith.constant 0 : index
    %0 = vector.load %arg1[%c0, %c0_0] : memref<8x256xf32, #tpu.memory_space<vmem>>, vector<8x256xf32>
    %c0_1 = arith.constant 0 : index
    %c0_2 = arith.constant 0 : index
    %1 = vector.load %arg2[%c0_1, %c0_2] : memref<8x256xf32, #tpu.memory_space<vmem>>, vector<8x256xf32>
    tpu.vector_store %arg2[%c0_1, %c0_2], %0 {strides = array<i32>} : memref<8x256xf32, #tpu.memory_space<vmem>>, vector<8x256xf32>,
    return
  }
  func.func @transform_0(%arg0: i32) -> (i32, i32) {
    %c0_i32 = arith.constant 0 : i32
    %c0_i32_0 = arith.constant 0 : i32
    return %arg0, %c0_i32 : i32, i32
  }
  func.func @transform_1(%arg0: i32) -> (i32, i32) {
    %c0_i32 = arith.constant 0 : i32
    %c0_i32_0 = arith.constant 0 : i32
    return %arg0, %c0_i32 : i32, i32
  }
}

</mosaic_0001>

<llo_original>
// kernel: tpu_custom_call.1
$region0: #{tpu_custom_call.1}
  #allocation0 [shape = 'u32[]', space=smem, size = 0x4, offset = 0x4, fixed_abs, tag = 'smem constant byte address 0x4 - core index']
  #allocation1 [shape = 'u32[144,128]{1,0:T(1,128)}', space=vmem, size = 0x12000, scoped, tag = 'internal scratch']
  %s0 = inlined_call_operand.hbm [shape: f32[8,256], index: 0, kind: input, shape index: {}]
  %s1 = inlined_call_operand.hbm [shape: f32[8,256], index: 1, kind: output, shape index: {}]
  %s2 = sld [smem:[#allocation0]]
  $region18: #{tpu_custom_call.1} parent=0
    _
  %s4 = ssub.s32 1, %s2
  %s5 = scalar_select 0, %s4, %s2
  $region1: #{tpu_custom_call.1} parent=0
    #allocation2 [shape = 'u8[8192]{0}', space=vmem, size = 0x2000, scoped, tag = 'input window, operand 0, single buffered']
    #allocation3 [shape = 's32[1]{0}', space=sflag, size = 0x4, scoped, tag = 'scoped memory for tpu_custom_call.1']
    #allocation4 [shape = 's32[1]{0}', space=sflag, size = 0x4, scoped, tag = 'scoped memory for tpu_custom_call.1']
    #allocation5 [shape = 'u8[8192]{0}', space=vmem, size = 0x2000, scoped, tag = 'output window, operand 0, single buffered']
    %6 = vsyncpa [#allocation3], 0
    %7 = vsyncpa [#allocation4], 0
    // Predicated region
    $region2: #{tpu_custom_call.1} parent=1 // pred_check
      _
    $region3: #{tpu_custom_call.1} parent=1 // pred_check_branch
      %9 = sbr.rel (0) target = $region5
    $region4: #{tpu_custom_call.1} parent=1 // pred_region
      %s11 = ssub.s32 256, 256
      %12 = vsyncadd [#allocation3], %s11
      %s14 = sshll.u32 [#allocation2], 4
      %s15 = int_to_ptr.vmem [resolvable:$true] %s14
      %17 = dma.hbm_to_vmem [thread:$0]  %s0, 256, %s15, [#allocation3]
    $region5: #{tpu_custom_call.1} parent=1 // pred_fallthru
      _
    // Predicated region
    $region6: #{tpu_custom_call.1} parent=1 // pred_check
      _
    $region7: #{tpu_custom_call.1} parent=1 // pred_check_branch
      %19 = sbr.rel (0) target = $region9
    $region8: #{tpu_custom_call.1} parent=1 // pred_region
      %20 = dma.done [#allocation3], 256
    $region9: #{tpu_custom_call.1} parent=1 // pred_fallthru
      _
    %v21 = vld [vmem:[#allocation2] sm:$0xff]
    %v22 = vld [vmem:[#allocation2 + $0x8] sm:$0xff]
    %23 = vst [vmem:[#allocation5] sm:$0xff] %v21
    %24 = vst [vmem:[#allocation5 + $0x8] sm:$0xff] %v22
    // Predicated region
    $region10: #{tpu_custom_call.1} parent=1 // pred_check
      _
    $region11: #{tpu_custom_call.1} parent=1 // pred_check_branch
      %26 = sbr.rel (0) target = $region13
    $region12: #{tpu_custom_call.1} parent=1 // pred_region
      %s28 = ssub.s32 256, 256
      %29 = vsyncadd [#allocation4], %s28
      %s31 = sshll.u32 [#allocation5], 4
      %s32 = int_to_ptr.vmem [resolvable:$true] %s31
      %34 = dma.vmem_to_hbm [thread:$0]  %s32, 256, %s1, [#allocation4]
    $region13: #{tpu_custom_call.1} parent=1 // pred_fallthru
      _
    // Predicated region
    $region14: #{tpu_custom_call.1} parent=1 // pred_check
      _
    $region15: #{tpu_custom_call.1} parent=1 // pred_check_branch
      %36 = sbr.rel (0) target = $region17
    $region16: #{tpu_custom_call.1} parent=1 // pred_region
      %37 = dma.done [#allocation4], 256
    $region17: #{tpu_custom_call.1} parent=1 // pred_fallthru
      _
    %38 = vsyncpa [#allocation3], 1
    %39 = vsyncpa [#allocation4], 1

</llo_original>
